<compile_context>
chip_gen: v5e
topology: v5e:2x2
jax: 0.10.0
libtpu: 0.0.40
codegen_flags: <defaults>
</compile_context>

<pallas_src>
import jax
import jax.numpy as jnp
import numpy as np
from jax.experimental import pallas as pl
from jax.experimental.pallas import tpu as pltpu


# ---------------------------------------------------------------------------
# Kernel 1: one-shot node projection (whole arrays in VMEM, runs once).
#   Pu = h @ Wu + b,  Pv = h @ Wv        -> bf16 tables for the edge kernel.
# The f32 matmul is a one-time O(N*F*C) cost; only the final bf16 rounding of
# the projected values affects accuracy (gather itself is exact).
# ---------------------------------------------------------------------------
def project_kernel(h_ref, wu_ref, wv_ref, b_ref, pu_ref, pv_ref):
    h = h_ref[...]                                                   # (N, F) f32
    pu = jnp.dot(h, wu_ref[...], preferred_element_type=jnp.float32) + b_ref[...]
    pv = jnp.dot(h, wv_ref[...], preferred_element_type=jnp.float32)
    pu_ref[...] = pu.astype(pu_ref.dtype)                            # (N, C) bf16
    pv_ref[...] = pv.astype(pv_ref.dtype)


# ---------------------------------------------------------------------------
# Kernel 2: per-edge-tile score,  score[e] = Pu[src[e]] + Pv[dst[e]].
# Vectorized one-hot gather on the MXU; ids come in as (tile_e, 1) VMEM blocks.
# ---------------------------------------------------------------------------
def edge_score_kernel(src_ref, dst_ref, pu_ref, pv_ref, out_ref):
    te = out_ref.shape[0]
    n = pu_ref.shape[0]
    node = jax.lax.broadcasted_iota(jnp.int32, (te, n), 1)   # lane index = node id
    oh_u = (node == src_ref[...]).astype(jnp.bfloat16)       # (TE, N) one-hot
    oh_v = (node == dst_ref[...]).astype(jnp.bfloat16)       # (TE, N) one-hot
    acc = jnp.dot(oh_u, pu_ref[...], preferred_element_type=jnp.float32)
    acc = acc + jnp.dot(oh_v, pv_ref[...], preferred_element_type=jnp.float32)
    out_ref[...] = acc                                       # (TE, C) f32


def mlp_predictor_forward(h, src, dst, W, b, *, tile_e=1024):
    """h: [N, F] node features; src/dst: [E] int edge endpoints;
    W: [C, 2F] (PyTorch nn.Linear layout); b: [C].  Returns [E, C] f32 scores.

    tile_e guidance: 512-1024 on v5e, 1024-4096 on v6e (128 MiB VMEM),
    ~1024 on v7x (64 MiB/TC; resident tables are duplicated on both cores).
    """
    N, F = h.shape
    C = W.shape[0]
    E = src.shape[0]
    assert W.shape == (C, 2 * F) and b.shape == (C,)
    assert tile_e % 8 == 0, "edge tile must be a multiple of 8 (f32 sublane tile)"

    num_tiles = pl.cdiv(E, tile_e)
    e_pad = num_tiles * tile_e

    # --- one-time node projection (Pallas kernel) ---
    h32 = jnp.asarray(h, jnp.float32)
    Wu = jnp.asarray(W[:, :F].T, jnp.float32)        # [F, C]
    Wv = jnp.asarray(W[:, F:].T, jnp.float32)        # [F, C]
    b2 = jnp.asarray(b, jnp.float32).reshape(1, C)   # [1, C]
    pu, pv = pl.pallas_call(
        project_kernel,
        out_shape=(jax.ShapeDtypeStruct((N, C), jnp.bfloat16),
                   jax.ShapeDtypeStruct((N, C), jnp.bfloat16)),
    )(h32, Wu, Wv, b2)

    # --- per-edge gather+add, tiled over E ---
    # Edge ids as (e_pad, 1) int32 so each grid step sees its TE ids as a VMEM
    # block (no SMEM capacity wall).  Pad rows index node 0; sliced off below.
    src2 = jnp.pad(jnp.asarray(src, jnp.int32), (0, e_pad - E)).reshape(e_pad, 1)
    dst2 = jnp.pad(jnp.asarray(dst, jnp.int32), (0, e_pad - E)).reshape(e_pad, 1)

    cost = pl.CostEstimate(
        flops=2 * 2 * e_pad * N * C,          # two one-hot matmuls per edge tile
        transcendentals=0,
        bytes_accessed=(2 * e_pad * 4         # src/dst ids
                        + 2 * N * C * 2       # resident bf16 projection tables
                        + e_pad * C * 4),     # output scores
    )

    out = pl.pallas_call(
        edge_score_kernel,
        out_shape=jax.ShapeDtypeStruct((e_pad, C), jnp.float32),
        grid_spec=pltpu.PrefetchScalarGridSpec(
            num_scalar_prefetch=0,
            grid=(num_tiles,),
            in_specs=[
                pl.BlockSpec((tile_e, 1), lambda i: (i, 0)),  # src ids tile
                pl.BlockSpec((tile_e, 1), lambda i: (i, 0)),  # dst ids tile
                pl.BlockSpec((N, C), lambda i: (0, 0)),       # Pu (+bias): resident
                pl.BlockSpec((N, C), lambda i: (0, 0)),       # Pv: resident
            ],
            out_specs=pl.BlockSpec((tile_e, C), lambda i: (i, 0)),
        ),
        compiler_params=pltpu.CompilerParams(
            # Independent edge tiles -> shard across v7x's two TensorCores
            # (no-op on single-TC v5e/v6e).  Working set is tiny, so the
            # default scoped-VMEM limit is left untouched on all generations.
            dimension_semantics=("parallel",),
        ),
        cost_estimate=cost,
    )(src2, dst2, pu, pv)

    return out[:E]


if __name__ == "__main__":
    # Small synthetic "graph": N nodes, E edges, F input features, C classes.
    # E=500 with tile_e=128 -> padded to 512, 4 even grid steps (exercises the
    # padded final tile and balances both TensorCores on v7x).
    N, E, F, C = 32, 500, 32, 4

    key = jax.random.PRNGKey(0)
    k_h, k_w, k_b, k_src, k_dst = jax.random.split(key, 5)

    h = jax.random.normal(k_h, (N, F), dtype=jnp.float32)
    src = jax.random.randint(k_src, (E,), 0, N, dtype=jnp.int32)
    dst = jax.random.randint(k_dst, (E,), 0, N, dtype=jnp.int32)

    # Deterministic nn.Linear(2F, C) init (PyTorch default: U(+-1/sqrt(2F))).
    bound = 1.0 / np.sqrt(2 * F)
    W = jax.random.uniform(k_w, (C, 2 * F), jnp.float32, -bound, bound)
    b = jax.random.uniform(k_b, (C,), jnp.float32, -bound, bound)

    score = mlp_predictor_forward(h, src, dst, W, b, tile_e=128)
    score = jax.block_until_ready(score)

    # Pure-JAX f32 reference (mirrors the PyTorch forward exactly).
    v = jnp.concatenate([h[src], h[dst]], axis=1)      # [E, 2F]
    ref = v @ W.T + b                                   # [E, C]
    assert score.shape == (E, C)
    # Only precision loss: the one-time bf16 rounding of the projected tables.
    np.testing.assert_allclose(np.asarray(score), np.asarray(ref),
                               rtol=1e-2, atol=1e-2)

    print("KERNEL_OK")
</pallas_src>

<mosaic_0001>
module attributes {stable_mosaic.version = 11 : i64} {
  func.func @project_kernel(%arg0: memref<32x32xf32, #tpu.memory_space<vmem>>, %arg1: memref<32x4xf32, #tpu.memory_space<vmem>>, %arg2: memref<32x4xf32, #tpu.memory_space<vmem>>, %arg3: memref<1x4xf32, #tpu.memory_space<vmem>>, %arg4: memref<32x4xbf16, #tpu.memory_space<vmem>>, %arg5: memref<32x4xbf16, #tpu.memory_space<vmem>>) attributes {dimension_semantics = [], scalar_prefetch = 0 : i64, scratch_operands = 0 : i64, tpu.core_type = #tpu.core_type<tc>} {
    %c0 = arith.constant 0 : index
    %c0_0 = arith.constant 0 : index
    %0 = vector.load %arg0[%c0, %c0_0] : memref<32x32xf32, #tpu.memory_space<vmem>>, vector<32x32xf32>
    %c0_1 = arith.constant 0 : index
    %c0_2 = arith.constant 0 : index
    %1 = vector.load %arg1[%c0_1, %c0_2] : memref<32x4xf32, #tpu.memory_space<vmem>>, vector<32x4xf32>
    %cst = arith.constant dense<0.000000e+00> : vector<32x4xf32>
    %2 = tpu.matmul %0, %1, %cst {dimension_numbers = #tpu.dot_dimension_numbers<[1], [0], [0], [1], [0, 0, 1, 1], [], []>} : vector<32x32xf32>, vector<32x4xf32>, vector<32x4xf32> -> vector<32x4xf32>
    %c0_3 = arith.constant 0 : index
    %c0_4 = arith.constant 0 : index
    %3 = vector.load %arg3[%c0_3, %c0_4] : memref<1x4xf32, #tpu.memory_space<vmem>>, vector<1x4xf32>
    %4 = vector.broadcast %3 : vector<1x4xf32> to vector<32x4xf32>
    %5 = arith.addf %2, %4 : vector<32x4xf32>
    %c0_5 = arith.constant 0 : index
    %c0_6 = arith.constant 0 : index
    %6 = vector.load %arg2[%c0_5, %c0_6] : memref<32x4xf32, #tpu.memory_space<vmem>>, vector<32x4xf32>
    %cst_7 = arith.constant dense<0.000000e+00> : vector<32x4xf32>
    %7 = tpu.matmul %0, %6, %cst_7 {dimension_numbers = #tpu.dot_dimension_numbers<[1], [0], [0], [1], [0, 0, 1, 1], [], []>} : vector<32x32xf32>, vector<32x4xf32>, vector<32x4xf32> -> vector<32x4xf32>
    %8 = arith.truncf %5 : vector<32x4xf32> to vector<32x4xbf16>
    %c0_8 = arith.constant 0 : index
    %c0_9 = arith.constant 0 : index
    %9 = vector.load %arg4[%c0_8, %c0_9] : memref<32x4xbf16, #tpu.memory_space<vmem>>, vector<32x4xbf16>
    tpu.vector_store %arg4[%c0_8, %c0_9], %8 {strides = array<i32>} : memref<32x4xbf16, #tpu.memory_space<vmem>>, vector<32x4xbf16>,
    %10 = arith.truncf %7 : vector<32x4xf32> to vector<32x4xbf16>
    %c0_10 = arith.constant 0 : index
    %c0_11 = arith.constant 0 : index
    %11 = vector.load %arg5[%c0_10, %c0_11] : memref<32x4xbf16, #tpu.memory_space<vmem>>, vector<32x4xbf16>
    tpu.vector_store %arg5[%c0_10, %c0_11], %10 {strides = array<i32>} : memref<32x4xbf16, #tpu.memory_space<vmem>>, vector<32x4xbf16>,
    return
  }
}

</mosaic_0001>

<llo_original>
// kernel: tpu_custom_call.1
$region0: #{tpu_custom_call.1}
  #allocation0 [shape = 'u32[]', space=smem, size = 0x4, offset = 0x4, fixed_abs, tag = 'smem constant byte address 0x4 - core index']
  #allocation1 [shape = 'u32[72,128]{1,0:T(1,128)}', space=vmem, size = 0x9000, scoped, tag = 'internal scratch']
  %s0 = inlined_call_operand.vmem [shape: f32[32,32], index: 0, kind: input, shape index: {}]
  %s1 = inlined_call_operand.vmem [shape: f32[32,4], index: 1, kind: input, shape index: {}]
  %s2 = inlined_call_operand.vmem [shape: f32[32,4], index: 2, kind: input, shape index: {}]
  %s3 = inlined_call_operand.vmem [shape: f32[1,4], index: 3, kind: input, shape index: {}]
  %s4 = inlined_call_operand.vmem [shape: bf16[32,4], index: 4, kind: output, shape index: {0}]
  %s5 = inlined_call_operand.vmem [shape: bf16[32,4], index: 5, kind: output, shape index: {1}]
  %6 = xla_tuple %s4, %s5
  %s7 = sld [smem:[#allocation0]]
  $region34: #{tpu_custom_call.1} parent=0
    _
  %s9 = ssub.s32 1, %s7
  %s10 = scalar_select 0, %s9, %s7
  // Predicated region
  $region2: #{tpu_custom_call.1} parent=0 // pred_check
    _
  $region3: #{tpu_custom_call.1} parent=0 // pred_check_branch
    %12 = sbr.rel (0) target = $region5
  $region4: #{tpu_custom_call.1} parent=0 // pred_region
    _
  $region5: #{tpu_custom_call.1} parent=0 // pred_fallthru
    _
  // Predicated region
  $region6: #{tpu_custom_call.1} parent=0 // pred_check
    _
  $region7: #{tpu_custom_call.1} parent=0 // pred_check_branch
    %14 = sbr.rel (0) target = $region9
  $region8: #{tpu_custom_call.1} parent=0 // pred_region
    _
  $region9: #{tpu_custom_call.1} parent=0 // pred_fallthru
    _
  // Predicated region
  $region10: #{tpu_custom_call.1} parent=0 // pred_check
    _
  $region11: #{tpu_custom_call.1} parent=0 // pred_check_branch
    %16 = sbr.rel (0) target = $region13
  $region12: #{tpu_custom_call.1} parent=0 // pred_region
    _
  $region13: #{tpu_custom_call.1} parent=0 // pred_fallthru
    _
  // Predicated region
  $region14: #{tpu_custom_call.1} parent=0 // pred_check
    _
  $region15: #{tpu_custom_call.1} parent=0 // pred_check_branch
    %18 = sbr.rel (0) target = $region17
  $region16: #{tpu_custom_call.1} parent=0 // pred_region
    _
  $region17: #{tpu_custom_call.1} parent=0 // pred_fallthru
    _
  %v19 = vld [vmem:[%s0] sm:$0xff]
  %v20 = vld [vmem:[%s0 + $0x8] sm:$0xff]
  %v21 = vld [vmem:[%s0 + $0x10] sm:$0xff]
  %v22 = vld [vmem:[%s0 + $0x18] sm:$0xff]
  %v23 = vld [vmem:[%s1] sm:$0xff]
  %v24 = vld [vmem:[%s1 + $0x8] sm:$0xff]
  %v25 = vld [vmem:[%s1 + $0x10] sm:$0xff]
  %v26 = vld [vmem:[%s1 + $0x18] sm:$0xff]
  %v27 = vld [vmem:[%s3] sm:$0x1]
  %v29 = vperm.slane %v27, 0
  %vm31 = vcmask 261120
  %v33 = vsel %vm31, %v19, 0
  %v36 = vsel %vm31, %v20, 0
  %v39 = vsel %vm31, %v21, 0
  %v42 = vsel %vm31, %v22, 0
  %44 = vmatpush.msra.mxu0 0.0
  %45 = vmatpush.msra.mxu0 0.0
  %46 = vmatpush.msra.mxu0 0.0
  %47 = vmatpush.msra.mxu0 0.0
  %48 = vmatpush.msra.mxu0 0.0
  %49 = vmatpush.msra.mxu0 0.0
  %50 = vmatpush.msra.mxu0 0.0
  %51 = vmatpush.msra.mxu0 0.0
  %52 = vmatpush.msra.mxu0 0.0
  %53 = vmatpush.msra.mxu0 0.0
  %54 = vmatpush.msra.mxu0 0.0
  %55 = vmatpush.msra.mxu0 0.0
  %56 = vmatpush.msra.mxu0 %v26
  %57 = vmatpush.msra.mxu0 %v25
  %58 = vmatpush.msra.mxu0 %v24
  %59 = vmatpush.msra.mxu0 %v23
  %60 = vmatmul.f32.gmra.mxu0 %v33
  %v61 = vpop.f32.mrf.mxu0
  %v62 = vadd.f32 %v29, %v61
  %63 = vmatmul.f32.gmra.mxu0 %v36
  %v64 = vpop.f32.mrf.mxu0
  %v65 = vadd.f32 %v29, %v64
  %66 = vmatmul.f32.gmra.mxu0 %v39
  %v67 = vpop.f32.mrf.mxu0
  %v68 = vadd.f32 %v29, %v67
  %69 = vmatmul.f32.gmra.mxu0 %v42
  %v70 = vpop.f32.mrf.mxu0
  %v71 = vadd.f32 %v29, %v70
  %72 = vdwg.mxu0
  %v73 = vld [vmem:[%s2] sm:$0xff]
  %v74 = vld [vmem:[%s2 + $0x8] sm:$0xff]
  %v75 = vld [vmem:[%s2 + $0x10] sm:$0xff]
  %v76 = vld [vmem:[%s2 + $0x18] sm:$0xff]
  %77 = vmatpush.msra.mxu0 0.0
  %78 = vmatpush.msra.mxu0 0.0
  %79 = vmatpush.msra.mxu0 0.0
  %80 = vmatpush.msra.mxu0 0.0
  %81 = vmatpush.msra.mxu0 0.0
  %82 = vmatpush.msra.mxu0 0.0
  %83 = vmatpush.msra.mxu0 0.0
  %84 = vmatpush.msra.mxu0 0.0
  %85 = vmatpush.msra.mxu0 0.0
  %86 = vmatpush.msra.mxu0 0.0
  %87 = vmatpush.msra.mxu0 0.0
  %88 = vmatpush.msra.mxu0 0.0
  %89 = vmatpush.msra.mxu0 %v76
  %90 = vmatpush.msra.mxu0 %v75
  %91 = vmatpush.msra.mxu0 %v74
  %92 = vmatpush.msra.mxu0 %v73
  %93 = vmatmul.f32.gmra.mxu0 %v33
  %v94 = vpop.f32.mrf.mxu0
  %v95 = vadd.f32 0.0, %v94
  %96 = vmatmul.f32.gmra.mxu0 %v36
  %v97 = vpop.f32.mrf.mxu0
  %v98 = vadd.f32 0.0, %v97
  %99 = vmatmul.f32.gmra.mxu0 %v39
  %v100 = vpop.f32.mrf.mxu0
  %v101 = vadd.f32 0.0, %v100
  %102 = vmatmul.f32.gmra.mxu0 %v42
  %v103 = vpop.f32.mrf.mxu0
  %v104 = vadd.f32 0.0, %v103
  %105 = vdwg.mxu0
  %v106 = vpack.c.bf16 %v62, %v62
  %v107 = vpack.c.bf16 %v65, %v65
  %v108 = vpack.c.bf16 %v68, %v68
  %v109 = vpack.c.bf16 %v71, %v71
  %vm110 = vcmask 27648
  %111 = vst.msk [vmem:[%s4] sm:$0xf] %vm110, %v106
  %112 = vst.msk [vmem:[%s4 + $0x4] sm:$0xf] %vm110, %v107
  %113 = vst.msk [vmem:[%s4 + $0x8] sm:$0xf] %vm110, %v108
  %114 = vst.msk [vmem:[%s4 + $0xc] sm:$0xf] %vm110, %v109
  %v115 = vpack.c.bf16 %v95, %v95
  %v116 = vpack.c.bf16 %v98, %v98
  %v117 = vpack.c.bf16 %v101, %v101
  %v118 = vpack.c.bf16 %v104, %v104
  %119 = vst.msk [vmem:[%s5] sm:$0xf] %vm110, %v115
  %120 = vst.msk [vmem:[%s5 + $0x4] sm:$0xf] %vm110, %v116
  %121 = vst.msk [vmem:[%s5 + $0x8] sm:$0xf] %vm110, %v117
  %122 = vst.msk [vmem:[%s5 + $0xc] sm:$0xf] %vm110, %v118
  // Predicated region
  $region18: #{tpu_custom_call.1} parent=0 // pred_check
    _
  $region19: #{tpu_custom_call.1} parent=0 // pred_check_branch
    %124 = sbr.rel (0) target = $region21
  $region20: #{tpu_custom_call.1} parent=0 // pred_region
    _
  $region21: #{tpu_custom_call.1} parent=0 // pred_fallthru
    _
  // Predicated region
  $region22: #{tpu_custom_call.1} parent=0 // pred_check
    _
  $region23: #{tpu_custom_call.1} parent=0 // pred_check_branch
    %126 = sbr.rel (0) target = $region25
  $region24: #{tpu_custom_call.1} parent=0 // pred_region
    _
  $region25: #{tpu_custom_call.1} parent=0 // pred_fallthru
    _
  // Predicated region
  $region26: #{tpu_custom_call.1} parent=0 // pred_check
    _
  $region27: #{tpu_custom_call.1} parent=0 // pred_check_branch
    %128 = sbr.rel (0) target = $region29
  $region28: #{tpu_custom_call.1} parent=0 // pred_region
    _
  $region29: #{tpu_custom_call.1} parent=0 // pred_fallthru
    _
  // Predicated region
  $region30: #{tpu_custom_call.1} parent=0 // pred_check
    _
  $region31: #{tpu_custom_call.1} parent=0 // pred_check_branch
    %130 = sbr.rel (0) target = $region33
  $region32: #{tpu_custom_call.1} parent=0 // pred_region
    _
  $region33: #{tpu_custom_call.1} parent=0 // pred_fallthru
    _

</llo_original>
